<compile_context>
chip_gen: v7x
topology: tpu7x:2x2x1
jax: 0.10.0
libtpu: 0.0.40
codegen_flags: <defaults>
</compile_context>

<pallas_src>
import math
import functools

import jax
import jax.numpy as jnp
from jax.experimental import pallas as pl
from jax.experimental.pallas import tpu as pltpu

_DEF_EPSILON = 1e-9
_LN2 = math.log(2.0)


def _cce_kernel(pred_ref, tgt_ref, out_ref, *, num_classes, tile_c, epsilon, needs_mask):
    t = pl.program_id(0)
    tile_start = t * tile_c

    p = pred_ref[...].astype(jnp.float32)          # (N, TILE_C) — cast in-kernel (bf16 OK in HBM)
    tgt = tgt_ref[...]                             # (N, 1) int32 class indices

    # Global class ids of this tile's columns.
    col = tile_start + jax.lax.broadcasted_iota(jnp.int32, p.shape, 1)

    if needs_mask:                                 # last tile may be padded past C
        valid = col < num_classes
        p = jnp.where(valid, p, 0.0)

    # --- softmax over axis 0 (batch axis), numerically stable; columns independent ---
    m = jnp.max(p, axis=0, keepdims=True)          # (1, TILE_C)
    e = jnp.exp(p - m)                             # (N, TILE_C)   EUP: 1/elem
    denom = jnp.sum(e, axis=0, keepdims=True)      # (1, TILE_C)
    # approx=False keeps the result bit-close to the pure-JAX reference; the divide
    # is only over a (1, TILE_C) vector so it is not on the critical path.
    sm = e * pl.reciprocal(denom, approx=False)

    pe = sm + epsilon                              # epsilon added before BOTH log terms
    # Natural log; log2 scaling + the 1/(N*C) mean are folded into ONE scalar
    # multiply in the wrapper. Clamp guards 1-pe against a non-positive argument.
    log1m = jnp.log(jnp.maximum(1.0 - pe, 1e-30))  # (N, TILE_C)   EUP: 1/elem

    if needs_mask:
        sum_log1m = jnp.sum(jnp.where(valid, log1m, 0.0))
    else:
        sum_log1m = jnp.sum(log1m)

    # --- target-column correction: replace log(1-pe_t) by log(pe_t) per row ---
    is_tgt = col == tgt                                             # (N, TILE_C) bool
    in_tile = (tgt >= tile_start) & (tgt < tile_start + tile_c)     # (N, 1) bool
    pe_t = jnp.sum(jnp.where(is_tgt, pe, 0.0), axis=1, keepdims=True)      # (N, 1)
    l1m_t = jnp.sum(jnp.where(is_tgt, log1m, 0.0), axis=1, keepdims=True)  # (N, 1)
    pe_t_safe = jnp.where(in_tile, pe_t, 1.0)                       # log(1)=0 when absent
    corr = jnp.where(in_tile, jnp.log(pe_t_safe) - l1m_t, 0.0)      # N logs per tile

    partial = sum_log1m + jnp.sum(corr)            # sum over this tile of ln-terms

    # Lane-dense (1,128) partial write: partial/128 broadcast to all 128 lanes sums
    # back exactly (power-of-two scaling), so jnp.sum in the wrapper recovers it.
    out_ref[...] = jnp.full((1, 128), partial * (1.0 / 128.0), dtype=jnp.float32)


def _pick_tile_c(n, c, max_lanes=2048, vmem_budget_bytes=8 << 20):
    """Class-axis tile: multiple of 128 (or full C when C<=128), sized so the
    double-buffered input plus a few (N, T) f32 temporaries stay well inside the
    smallest scoped-VMEM budget across generations (v7x: 32 MiB scoped)."""
    if c <= 128:
        return c                                   # full extent — always legal
    t = min(max_lanes, pl.cdiv(c, 128) * 128)
    # ~2x double-buffered input + ~4 live (N, T) f32 temporaries
    while t > 128 and 6 * n * t * 4 > vmem_budget_bytes:
        t -= 128
    return t


def categorical_crossentropy(pred, target, epsilon=_DEF_EPSILON, max_tile_c=2048):
    """pred: (N, C) float array; target: (N,) int class indices. Returns scalar f32."""
    n, c = pred.shape
    tgt2d = target.astype(jnp.int32).reshape(n, 1)

    tile_c = _pick_tile_c(n, c, max_lanes=max_tile_c)
    grid = pl.cdiv(c, tile_c)
    needs_mask = (c % tile_c) != 0

    kernel = functools.partial(
        _cce_kernel,
        num_classes=c,
        tile_c=tile_c,
        epsilon=float(epsilon),
        needs_mask=needs_mask,
    )

    partials = pl.pallas_call(
        kernel,
        out_shape=jax.ShapeDtypeStruct((1, 128 * grid), jnp.float32),
        grid=(grid,),
        in_specs=[
            pl.BlockSpec((n, tile_c), lambda i: (0, i)),   # pred: tile over classes
            pl.BlockSpec((n, 1), lambda i: (0, 0)),        # targets: same block every step
        ],
        out_specs=pl.BlockSpec((1, 128), lambda i: (0, i)),  # per-tile partial sums
        compiler_params=pltpu.CompilerParams(
            dimension_semantics=("parallel",),             # tiles are independent
        ),
        cost_estimate=pl.CostEstimate(
            flops=12 * n * c,
            transcendentals=2 * n * c + n * grid,
            bytes_accessed=4 * n * c + 4 * n + 4 * 128 * grid,
        ),
    )(pred, tgt2d)

    # -mean_{N,C}(log2 terms) == -(sum of ln terms) / (N * C * ln 2)
    return -jnp.sum(partials) / jnp.float32(n * c * _LN2)


def _reference(pred, target):
    """Pure-JAX reference mirroring the PyTorch code (for sanity check)."""
    pred = jax.nn.softmax(pred.astype(jnp.float32), axis=0)
    n, c = pred.shape
    tar = jax.nn.one_hot(target, c, dtype=jnp.float32)
    pe = pred + _DEF_EPSILON
    term = tar * (jnp.log(pe) / jnp.log(2.0)) + (1.0 - tar) * (jnp.log(1.0 - pe) / jnp.log(2.0))
    loss = -jnp.mean(term, axis=1)
    return jnp.mean(loss)


if __name__ == "__main__":
    key = jax.random.PRNGKey(0)
    k1, k2, k3, k4 = jax.random.split(key, 4)

    # Case 1: tiny single-tile shape (matches the original demo).
    N1, C1 = 8, 32
    pred1 = jax.random.normal(k1, (N1, C1), dtype=jnp.float32)
    tgt1 = jax.random.randint(k2, (N1,), 0, C1, dtype=jnp.int32)
    loss1 = jax.block_until_ready(categorical_crossentropy(pred1, tgt1))
    ref1 = jax.block_until_ready(_reference(pred1, tgt1))
    assert jnp.allclose(loss1, ref1, rtol=1e-5, atol=1e-5), (loss1, ref1)

    # Case 2: multi-tile grid over the class axis (exercises padding mask,
    # parallel grid semantics, and the target-in-tile correction path).
    N2, C2 = 16, 640
    pred2 = jax.random.normal(k3, (N2, C2), dtype=jnp.float32)
    tgt2 = jax.random.randint(k4, (N2,), 0, C2, dtype=jnp.int32)
    loss2 = jax.block_until_ready(categorical_crossentropy(pred2, tgt2, max_tile_c=256))
    ref2 = jax.block_until_ready(_reference(pred2, tgt2))
    assert jnp.allclose(loss2, ref2, rtol=1e-5, atol=1e-5), (loss2, ref2)

    print("KERNEL_OK")
</pallas_src>

<mosaic_0001>
module attributes {stable_mosaic.version = 11 : i64} {
  func.func @_cce_kernel(%arg0: i32, %arg1: memref<8x32xf32, #tpu.memory_space<vmem>>, %arg2: memref<8x1xi32, #tpu.memory_space<vmem>>, %arg3: memref<1x128xf32, #tpu.memory_space<vmem>>) attributes {dimension_semantics = [#tpu.dimension_semantics<parallel>], iteration_bounds = array<i64: 1>, scalar_prefetch = 0 : i64, scratch_operands = 0 : i64, tpu.core_type = #tpu.core_type<tc>, window_params = [{transform_indices = @transform_0, window_bounds = array<i64: 8, 32>}, {pipeline_mode = #tpu.pipeline_mode<synchronous>, transform_indices = @transform_1, window_bounds = array<i64: 8, 1>}, {transform_indices = @transform_2, window_bounds = array<i64: 1, 128>}]} {
    %c32_i32 = arith.constant 32 : i32
    %0 = arith.muli %arg0, %c32_i32 : i32
    %c0 = arith.constant 0 : index
    %c0_0 = arith.constant 0 : index
    %1 = vector.load %arg1[%c0, %c0_0] : memref<8x32xf32, #tpu.memory_space<vmem>>, vector<8x32xf32>
    %c0_1 = arith.constant 0 : index
    %c0_2 = arith.constant 0 : index
    %2 = vector.load %arg2[%c0_1, %c0_2] : memref<8x1xi32, #tpu.memory_space<vmem>>, vector<8x1xi32>
    %3 = tpu.iota {dimensions = array<i32: 1>} : vector<8x32xi32>
    %4 = vector.broadcast %0 : i32 to vector<8x32xi32>
    %5 = arith.addi %4, %3 : vector<8x32xi32>
    %cst = arith.constant dense<0xFF800000> : vector<32xf32>
    %6 = vector.multi_reduction <maximumf>, %1, %cst [0] : vector<8x32xf32> to vector<32xf32>
    %7 = vector.shape_cast %6 : vector<32xf32> to vector<1x32xf32>
    %8 = vector.broadcast %7 : vector<1x32xf32> to vector<8x32xf32>
    %9 = arith.subf %1, %8 : vector<8x32xf32>
    %10 = math.exp %9 : vector<8x32xf32>
    %cst_3 = arith.constant dense<0.000000e+00> : vector<32xf32>
    %11 = vector.multi_reduction <add>, %10, %cst_3 [0] : vector<8x32xf32> to vector<32xf32>
    %12 = vector.shape_cast %11 : vector<32xf32> to vector<1x32xf32>
    %13 = tpu.reciprocal %12 : vector<1x32xf32> -> vector<1x32xf32>
    %14 = vector.broadcast %13 : vector<1x32xf32> to vector<8x32xf32>
    %15 = arith.mulf %10, %14 : vector<8x32xf32>
    %cst_4 = arith.constant 9.99999971E-10 : f32
    %16 = vector.broadcast %cst_4 : f32 to vector<8x32xf32>
    %17 = arith.addf %15, %16 : vector<8x32xf32>
    %cst_5 = arith.constant 1.000000e+00 : f32
    %18 = vector.broadcast %cst_5 : f32 to vector<8x32xf32>
    %19 = arith.subf %18, %17 : vector<8x32xf32>
    %cst_6 = arith.constant 1.000000e-30 : f32
    %20 = vector.broadcast %cst_6 : f32 to vector<8x32xf32>
    %21 = arith.maximumf %19, %20 : vector<8x32xf32>
    %22 = math.log %21 : vector<8x32xf32>
    %23 = vector.shape_cast %22 : vector<8x32xf32> to vector<1x8x32xf32>
    %cst_7 = arith.constant dense<0.000000e+00> : vector<1xf32>
    %24 = vector.multi_reduction <add>, %23, %cst_7 [1, 2] : vector<1x8x32xf32> to vector<1xf32>
    %25 = vector.shape_cast %24 : vector<1xf32> to vector<1x1x1xf32>
    %26 = vector.extract %25[0, 0, 0] : f32 from vector<1x1x1xf32>
    %27 = vector.broadcast %2 : vector<8x1xi32> to vector<8x32xi32>
    %28 = arith.cmpi eq, %5, %27 : vector<8x32xi32>
    %29 = vector.broadcast %0 : i32 to vector<8x1xi32>
    %30 = arith.cmpi sge, %2, %29 : vector<8x1xi32>
    %c32_i32_8 = arith.constant 32 : i32
    %31 = arith.addi %0, %c32_i32_8 : i32
    %32 = vector.broadcast %31 : i32 to vector<8x1xi32>
    %33 = arith.cmpi slt, %2, %32 : vector<8x1xi32>
    %34 = arith.andi %30, %33 : vector<8x1xi1>
    %cst_9 = arith.constant 0.000000e+00 : f32
    %35 = vector.broadcast %cst_9 : f32 to vector<8x32xf32>
    %36 = arith.select %28, %17, %35 : vector<8x32xi1>, vector<8x32xf32>
    %cst_10 = arith.constant dense<0.000000e+00> : vector<8xf32>
    %37 = vector.multi_reduction <add>, %36, %cst_10 [1] : vector<8x32xf32> to vector<8xf32>
    %38 = vector.shape_cast %37 : vector<8xf32> to vector<8x1xf32>
    %cst_11 = arith.constant 0.000000e+00 : f32
    %39 = vector.broadcast %cst_11 : f32 to vector<8x32xf32>
    %40 = arith.select %28, %22, %39 : vector<8x32xi1>, vector<8x32xf32>
    %cst_12 = arith.constant dense<0.000000e+00> : vector<8xf32>
    %41 = vector.multi_reduction <add>, %40, %cst_12 [1] : vector<8x32xf32> to vector<8xf32>
    %42 = vector.shape_cast %41 : vector<8xf32> to vector<8x1xf32>
    %cst_13 = arith.constant 1.000000e+00 : f32
    %43 = vector.broadcast %cst_13 : f32 to vector<8x1xf32>
    %44 = arith.select %34, %38, %43 : vector<8x1xi1>, vector<8x1xf32>
    %45 = math.log %44 : vector<8x1xf32>
    %46 = arith.subf %45, %42 : vector<8x1xf32>
    %cst_14 = arith.constant 0.000000e+00 : f32
    %47 = vector.broadcast %cst_14 : f32 to vector<8x1xf32>
    %48 = arith.select %34, %46, %47 : vector<8x1xi1>, vector<8x1xf32>
    %49 = vector.shape_cast %48 : vector<8x1xf32> to vector<1x8x1xf32>
    %cst_15 = arith.constant dense<0.000000e+00> : vector<1xf32>
    %50 = vector.multi_reduction <add>, %49, %cst_15 [1, 2] : vector<1x8x1xf32> to vector<1xf32>
    %51 = vector.shape_cast %50 : vector<1xf32> to vector<1x1x1xf32>
    %52 = vector.extract %51[0, 0, 0] : f32 from vector<1x1x1xf32>
    %53 = arith.addf %26, %52 : f32
    %cst_16 = arith.constant 7.812500e-03 : f32
    %54 = arith.mulf %53, %cst_16 : f32
    %55 = vector.broadcast %54 : f32 to vector<1x128xf32>
    %c0_17 = arith.constant 0 : index
    %c0_18 = arith.constant 0 : index
    %56 = vector.load %arg3[%c0_17, %c0_18] : memref<1x128xf32, #tpu.memory_space<vmem>>, vector<1x128xf32>
    tpu.vector_store %arg3[%c0_17, %c0_18], %55 {strides = array<i32>} : memref<1x128xf32, #tpu.memory_space<vmem>>, vector<1x128xf32>,
    return
  }
  func.func @transform_0(%arg0: i32) -> (i32, i32) {
    %c0_i32 = arith.constant 0 : i32
    %c0_i32_0 = arith.constant 0 : i32
    return %c0_i32, %arg0 : i32, i32
  }
  func.func @transform_1(%arg0: i32) -> (i32, i32) {
    %c0_i32 = arith.constant 0 : i32
    %c0_i32_0 = arith.constant 0 : i32
    %c0_i32_1 = arith.constant 0 : i32
    return %c0_i32, %c0_i32_0 : i32, i32
  }
  func.func @transform_2(%arg0: i32) -> (i32, i32) {
    %c0_i32 = arith.constant 0 : i32
    %c0_i32_0 = arith.constant 0 : i32
    return %c0_i32, %arg0 : i32, i32
  }
}

</mosaic_0001>

<llo_original>
// kernel: tpu_custom_call.1
$region0: #{tpu_custom_call.1}
  #allocation0 [shape = 'u32[]', space=smem, size = 0x4, offset = 0x4, fixed_abs, tag = 'smem constant byte address 0x4 - core index']
  #allocation1 [shape = 'u32[144,128]{1,0:T(1,128)}', space=vmem, size = 0x12000, scoped, tag = 'internal scratch']
  %s0 = inlined_call_operand.vmem [shape: f32[8,32], index: 0, kind: input, shape index: {}]
  %s1 = inlined_call_operand.vmem [shape: s32[8,1], index: 1, kind: input, shape index: {}]
  %s2 = inlined_call_operand.hbm [shape: f32[1,128], index: 2, kind: output, shape index: {}]
  %s3 = sld [smem:[#allocation0]]
  $region18: #{tpu_custom_call.1} parent=0
    _
  %s5 = ssub.s32 1, %s3
  %s6 = scalar_select 0, %s5, %s3
  $region1: #{tpu_custom_call.1} parent=0
    #allocation2 [shape = 'u8[512]{0}', space=vmem, size = 0x400, scoped, tag = 'output window, operand 0, single buffered']
    #allocation3 [shape = 's32[1]{0}', space=sflag, size = 0x4, scoped, tag = 'scoped memory for tpu_custom_call.1']
    %7 = vsyncpa [#allocation3], 0
    // Predicated region
    $region2: #{tpu_custom_call.1} parent=1 // pred_check
      _
    $region3: #{tpu_custom_call.1} parent=1 // pred_check_branch
      %9 = sbr.rel (0) target = $region5
    $region4: #{tpu_custom_call.1} parent=1 // pred_region
      _
    $region5: #{tpu_custom_call.1} parent=1 // pred_fallthru
      _
    // Predicated region
    $region6: #{tpu_custom_call.1} parent=1 // pred_check
      _
    $region7: #{tpu_custom_call.1} parent=1 // pred_check_branch
      %11 = sbr.rel (0) target = $region9
    $region8: #{tpu_custom_call.1} parent=1 // pred_region
      _
    $region9: #{tpu_custom_call.1} parent=1 // pred_fallthru
      _
    %s12 = smul.u32 0, 32
    %v13 = vld [vmem:[%s0] sm:$0xff]
    %v14 = vld [vmem:[%s1] sm:$0xff]
    %v15 = vlaneseq
    %v16 = vand.u32 %v15, 127
    %v17 = vstv %s12
    %v18 = vadd.s32 %v17, %v16
    %vm19 = vcmask 261120
    %v20 = vsel %vm19, %v13, -inf
    %v21 = vrot.slane %v20, 4
    %v22 = vmax.f32 %v20, %v21
    %v23 = vrot.slane %v22, 2
    %v24 = vmax.f32 %v22, %v23
    %v25 = vrot.slane %v24, 1
    %v26 = vmax.f32 %v24, %v25
    %v27 = vsub.f32 %v13, %v26
    %v28 = vmul.f32 %v27, 1.442695
    %v29 = vpow.pop %v28
    %v30 = vsel %vm19, %v29, 0.0
    %v31 = vrot.slane %v30, 4
    %v32 = vadd.f32 %v30, %v31
    %v33 = vrot.slane %v32, 2
    %v34 = vadd.f32 %v32, %v33
    %v35 = vrot.slane %v34, 1
    %v36 = vadd.f32 %v34, %v35
    %v37 = vrcp.pop %v36
    %v38 = vmul.f32 %v29, %v37
    %v39 = vadd.f32 %v38, 1e-09
    %v40 = vsub.f32 1.0, %v39
    %v41 = vmax.f32 %v40, 1e-30
    %v42 = vlog2.pop %v41
    %v43 = vmul.f32 %v42, 0.6931472
    %v44 = vsel %vm19, %v43, 0.0
    %45 = vadd.xlane.f32.xlu0 %v44
    %v46 = vpop.xlane.xlu0 %45
    %v47 = vrot.slane %v46, 4
    %v48 = vadd.f32 %v46, %v47
    %v49 = vrot.slane %v48, 2
    %v50 = vadd.f32 %v48, %v49
    %v51 = vrot.slane %v50, 1
    %v52 = vadd.f32 %v50, %v51
    %s53 = vtos %v52
    %54 = vset.pattern.permute.xlu0 0
    %55 = vperm.xlu0 %54, %v14
    %v56 = vpop.permute.xlu0 %55
    %vm57 = vcmp.eq.s32.totalorder %v18, %v56
    %vm58 = vcmp.ge.s32.totalorder %v14, %v17
    %s59 = sadd.s32 %s12, 32
    %v60 = vstv %s59
    %vm61 = vcmp.lt.s32.totalorder %v14, %v60
    %vm62 = vmand %vm58, %vm61
    %v63 = vsel %vm57, %v39, 0.0
    %v64 = vsel %vm19, %v63, 0.0
    %65 = vadd.xlane.f32.xlu0 %v64
    %v66 = vpop.xlane.xlu0 %65
    %v67 = vsel %vm57, %v43, 0.0
    %v68 = vsel %vm19, %v67, 0.0
    %69 = vadd.xlane.f32.xlu0 %v68
    %v70 = vpop.xlane.xlu0 %69
    %v71 = vsel %vm62, %v66, 1.0
    %v72 = vlog2.pop %v71
    %v73 = vmul.f32 %v72, 0.6931472
    %v74 = vsub.f32 %v73, %v70
    %v75 = vsel %vm62, %v74, 0.0
    %vm76 = vcmask 7168
    %v77 = vsel %vm76, %v75, 0.0
    %78 = vadd.xlane.f32.xlu0 %v77
    %v79 = vpop.xlane.xlu0 %78
    %v80 = vrot.slane %v79, 4
    %v81 = vadd.f32 %v79, %v80
    %v82 = vrot.slane %v81, 2
    %v83 = vadd.f32 %v81, %v82
    %v84 = vrot.slane %v83, 1
    %v85 = vadd.f32 %v83, %v84
    %s86 = vtos %v85
    %s87 = sadd.f32 %s53, %s86
    %s88 = smul.f32 %s87, 0.0078125
    %v89 = vstv %s88
    %90 = vst [vmem:[#allocation2] sm:$0x1] %v89
    // Predicated region
    $region10: #{tpu_custom_call.1} parent=1 // pred_check
      _
    $region11: #{tpu_custom_call.1} parent=1 // pred_check_branch
      %92 = sbr.rel (0) target = $region13
    $region12: #{tpu_custom_call.1} parent=1 // pred_region
      %s94 = ssub.s32 16, 16
      %95 = vsyncadd [#allocation3], %s94
      %s97 = sshll.u32 [#allocation2], 4
      %s98 = int_to_ptr.vmem [resolvable:$true] %s97
      %100 = dma.vmem_to_hbm [thread:$0]  %s98, 16, %s2, [#allocation3]
    $region13: #{tpu_custom_call.1} parent=1 // pred_fallthru
      _
    // Predicated region
    $region14: #{tpu_custom_call.1} parent=1 // pred_check
      _
    $region15: #{tpu_custom_call.1} parent=1 // pred_check_branch
      %102 = sbr.rel (0) target = $region17
    $region16: #{tpu_custom_call.1} parent=1 // pred_region
      %103 = dma.done [#allocation3], 16
    $region17: #{tpu_custom_call.1} parent=1 // pred_fallthru
      _
    %104 = vsyncpa [#allocation3], 1

</llo_original>
